<compile_context>
chip_gen: v7x
topology: tpu7x:2x2x1
jax: 0.10.0
libtpu: 0.0.40
codegen_flags: <defaults>
</compile_context>

<pallas_src>
import functools

import numpy as np
import jax
import jax.numpy as jnp
from jax.experimental import pallas as pl
from jax.experimental.pallas import tpu as pltpu

EPS = 1e-5            # nn.BatchNorm2d default eps
NEG_SLOPE = 0.2       # nn.LeakyReLU(0.2)
VMEM_LIMIT = 64 * 1024 * 1024
BLOCK_BYTES_BUDGET = 2 * 1024 * 1024   # target bytes for one activation slab block


# ----------------------------------------------------------------------------
# in-kernel helpers
# ----------------------------------------------------------------------------
def _conv3x3_rows(x, t_ref, bias, img_h):
    """SAME 3x3 conv of a lane-dense (R, W*Cin) row slab.

    x      : (R, W*Cin) f32 rows; R = G*img_h (G whole images stacked).
    t_ref  : (3, W*Cin, W*Cout) Ref, one block-Toeplitz matrix per kh tap
             (zero padding along W already folded in).
    bias   : (1, W*Cout) f32 conv bias tiled over W.
    img_h  : static image height (Python int).

    Zero padding along H (including image boundaries inside the slab) is
    handled with an XLU roll + iota mask.  Returns (R, W*Cout) f32.
    """
    r = x.shape[0]
    p0 = jnp.dot(x, t_ref[0], preferred_element_type=jnp.float32)   # tap kh=0
    p1 = jnp.dot(x, t_ref[1], preferred_element_type=jnp.float32)   # tap kh=1
    p2 = jnp.dot(x, t_ref[2], preferred_element_type=jnp.float32)   # tap kh=2

    h = jax.lax.broadcasted_iota(jnp.int32, (r, 1), 0) % img_h
    acc = p1 + bias
    # output row h gets the kh=0 contribution of input row h-1 (zero at h==0)
    acc = acc + jnp.where(h >= 1, pltpu.roll(p0, 1, 0), 0.0)
    # output row h gets the kh=2 contribution of input row h+1 (zero at h==H-1)
    acc = acc + jnp.where(h < img_h - 1, pltpu.roll(p2, r - 1, 0), 0.0)
    return acc


def _conv1_kernel(x_ref, t_ref, b_ref, y_ref, s_ref, ss_ref, *, img_h):
    """conv1 + bias on one slab of whole images; emits BN1 partial stats."""
    x = x_ref[...].astype(jnp.float32)                       # (RB, W*C)
    y = _conv3x3_rows(x, t_ref, b_ref[...].astype(jnp.float32), img_h)
    s_ref[0] = jnp.sum(y, axis=0, keepdims=True)             # (1, W*C)
    ss_ref[0] = jnp.sum(y * y, axis=0, keepdims=True)
    y_ref[...] = y.astype(y_ref.dtype)


def _bn1_act_conv2_kernel(y1_ref, sc_ref, sh_ref, t_ref, b_ref,
                          y2_ref, s_ref, ss_ref, *, img_h):
    """BN1 affine + LeakyReLU + conv2 + bias on one slab; BN2 partial stats."""
    y1 = y1_ref[...].astype(jnp.float32)                     # (RB, W*C)
    z = y1 * sc_ref[...] + sh_ref[...]                       # BN1 scale/shift
    z = jnp.where(z > 0, z, NEG_SLOPE * z)                   # LeakyReLU(0.2)
    y2 = _conv3x3_rows(z, t_ref, b_ref[...].astype(jnp.float32), img_h)
    s_ref[0] = jnp.sum(y2, axis=0, keepdims=True)
    ss_ref[0] = jnp.sum(y2 * y2, axis=0, keepdims=True)
    y2_ref[...] = y2.astype(y2_ref.dtype)


def _bn2_residual_kernel(y2_ref, res_ref, sc_ref, sh_ref, o_ref):
    """BN2 affine + residual add on lane-dense (RB, W*C) slabs."""
    y2 = y2_ref[...].astype(jnp.float32)
    res = res_ref[...].astype(jnp.float32)
    o_ref[...] = (y2 * sc_ref[...] + sh_ref[...] + res).astype(o_ref.dtype)


# ----------------------------------------------------------------------------
# wrapper-side weight / layout preparation
# ----------------------------------------------------------------------------
def _block_toeplitz(w_oihw, width):
    """(Cout, Cin, 3, 3) PyTorch conv weight -> (3, W*Cin, W*Cout) Toeplitz mats.

    T[kh][wi*Cin + ci, wo*Cout + co] = w[co, ci, kh, wi - wo + 1]
    for 0 <= wi - wo + 1 <= 2 (else 0), so a SAME 3x3 conv of an (R, W*Cin)
    lane-dense slab is  out = sum_kh shift_rows(x, kh-1) @ T[kh],
    with the zero padding along W folded into the matrix structure.
    """
    c_out, c_in, kh_sz, kw_sz = w_oihw.shape
    whw = jnp.transpose(w_oihw, (2, 3, 1, 0))                # (KH, KW, Cin, Cout)
    wi = jnp.arange(width)[:, None]
    wo = jnp.arange(width)[None, :]
    kw_idx = wi - wo + 1                                     # (W, W)
    valid = (kw_idx >= 0) & (kw_idx < kw_sz)
    kw_safe = jnp.clip(kw_idx, 0, kw_sz - 1)
    blocks = whw[:, kw_safe]                                 # (KH, W, W, Cin, Cout)
    blocks = blocks * valid[None, :, :, None, None].astype(whw.dtype)
    blocks = jnp.transpose(blocks, (0, 1, 3, 2, 4))          # (KH, Wi, Cin, Wo, Cout)
    return blocks.reshape(kh_sz, width * c_in, width * c_out)


def _pick_images_per_block(n, h, wc):
    """Largest divisor G of N whose slab (G*H, W*C) fits the VMEM block budget
    and keeps the sublane dim a multiple of 8 (or is the full batch)."""
    cap = max(1, BLOCK_BYTES_BUDGET // max(1, h * wc * 4))
    for g in range(min(n, cap), 0, -1):
        if n % g == 0 and ((g * h) % 8 == 0 or g == n):
            return g
    return n


def residual_block_forward(x_nchw, params):
    """x_nchw: (N, C, H, W) float32 (PyTorch layout). Returns (N, C, H, W)."""
    N, C, H, W = x_nchw.shape
    WC = W * C
    R = N * H
    cnt = float(N * H * W)

    # lane-dense layout: NCHW -> NHWC -> (N*H, W*C) row slab
    x_rows = jnp.transpose(x_nchw, (0, 2, 3, 1)).reshape(R, WC).astype(jnp.float32)

    t1 = _block_toeplitz(params["w1"], W).astype(jnp.float32)
    t2 = _block_toeplitz(params["w2"], W).astype(jnp.float32)
    b1 = jnp.tile(params["b1"].astype(jnp.float32), W).reshape(1, WC)
    b2 = jnp.tile(params["b2"].astype(jnp.float32), W).reshape(1, WC)

    G = _pick_images_per_block(N, H, WC)   # whole images per grid block
    RB = G * H
    NB = N // G

    cparams = pltpu.CompilerParams(dimension_semantics=("parallel",),
                                   vmem_limit_bytes=VMEM_LIMIT)

    slab_spec = pl.BlockSpec((RB, WC), lambda i: (i, 0))
    vec_spec = pl.BlockSpec((1, WC), lambda i: (0, 0))
    t_spec = pl.BlockSpec((3, WC, WC), lambda i: (0, 0, 0))
    stat_spec = pl.BlockSpec((1, 1, WC), lambda i: (i, 0, 0))

    # ---- stage 1: conv1 + bias, per-block BN1 partial sums -----------------
    y1, s1, ss1 = pl.pallas_call(
        functools.partial(_conv1_kernel, img_h=H),
        grid=(NB,),
        in_specs=[slab_spec, t_spec, vec_spec],
        out_specs=(slab_spec, stat_spec, stat_spec),
        out_shape=(jax.ShapeDtypeStruct((R, WC), jnp.float32),
                   jax.ShapeDtypeStruct((NB, 1, WC), jnp.float32),
                   jax.ShapeDtypeStruct((NB, 1, WC), jnp.float32)),
        compiler_params=cparams,
    )(x_rows, t1, b1)

    # finalize BN1 batch statistics (training mode, biased variance) and fold
    # into a per-channel affine (scale, shift), tiled over W for the lane layout
    sum1 = s1.reshape(NB, W, C).sum(axis=(0, 1))
    sumsq1 = ss1.reshape(NB, W, C).sum(axis=(0, 1))
    mean1 = sum1 / cnt
    var1 = jnp.maximum(sumsq1 / cnt - mean1 * mean1, 0.0)
    scale1 = params["g1"] * jax.lax.rsqrt(var1 + EPS)
    shift1 = params["be1"] - mean1 * scale1
    scale1_t = jnp.tile(scale1, W).reshape(1, WC).astype(jnp.float32)
    shift1_t = jnp.tile(shift1, W).reshape(1, WC).astype(jnp.float32)

    # ---- stage 2: BN1 affine + LeakyReLU + conv2 + bias, BN2 partial sums --
    y2, s2, ss2 = pl.pallas_call(
        functools.partial(_bn1_act_conv2_kernel, img_h=H),
        grid=(NB,),
        in_specs=[slab_spec, vec_spec, vec_spec, t_spec, vec_spec],
        out_specs=(slab_spec, stat_spec, stat_spec),
        out_shape=(jax.ShapeDtypeStruct((R, WC), jnp.float32),
                   jax.ShapeDtypeStruct((NB, 1, WC), jnp.float32),
                   jax.ShapeDtypeStruct((NB, 1, WC), jnp.float32)),
        compiler_params=cparams,
    )(y1, scale1_t, shift1_t, t2, b2)

    sum2 = s2.reshape(NB, W, C).sum(axis=(0, 1))
    sumsq2 = ss2.reshape(NB, W, C).sum(axis=(0, 1))
    mean2 = sum2 / cnt
    var2 = jnp.maximum(sumsq2 / cnt - mean2 * mean2, 0.0)
    scale2 = params["g2"] * jax.lax.rsqrt(var2 + EPS)
    shift2 = params["be2"] - mean2 * scale2
    scale2_t = jnp.tile(scale2, W).reshape(1, WC).astype(jnp.float32)
    shift2_t = jnp.tile(shift2, W).reshape(1, WC).astype(jnp.float32)

    # ---- stage 3: BN2 affine + residual add (element-wise over slabs) ------
    out_rows = pl.pallas_call(
        _bn2_residual_kernel,
        grid=(NB,),
        in_specs=[slab_spec, slab_spec, vec_spec, vec_spec],
        out_specs=slab_spec,
        out_shape=jax.ShapeDtypeStruct((R, WC), x_nchw.dtype),
        compiler_params=cparams,
    )(y2, x_rows, scale2_t, shift2_t)

    out_nhwc = out_rows.reshape(N, H, W, C)
    return jnp.transpose(out_nhwc, (0, 3, 1, 2))


# ----------------------------------------------------------------------------
# pure-JAX reference (matches PyTorch ResidualBlock.forward in training mode)
# ----------------------------------------------------------------------------
def reference_forward(x_nchw, params):
    x = jnp.transpose(x_nchw, (0, 2, 3, 1))  # NHWC

    def conv(h, w, b):
        w_hwio = jnp.transpose(w, (2, 3, 1, 0))
        y = jax.lax.conv_general_dilated(
            h, w_hwio, window_strides=(1, 1), padding="SAME",
            dimension_numbers=("NHWC", "HWIO", "NHWC"))
        return y + b.reshape(1, 1, 1, -1)

    def bn(h, g, be):
        mean = jnp.mean(h, axis=(0, 1, 2), keepdims=True)
        var = jnp.mean((h - mean) ** 2, axis=(0, 1, 2), keepdims=True)
        return (h - mean) / jnp.sqrt(var + EPS) * g.reshape(1, 1, 1, -1) \
            + be.reshape(1, 1, 1, -1)

    out = conv(x, params["w1"], params["b1"])
    out = bn(out, params["g1"], params["be1"])
    out = jnp.where(out > 0, out, NEG_SLOPE * out)
    out = conv(out, params["w2"], params["b2"])
    out = bn(out, params["g2"], params["be2"])
    out = out + x
    return jnp.transpose(out, (0, 3, 1, 2))


if __name__ == "__main__":
    # TODO(synk): BatchNorm2d running_mean/running_var buffer updates are a
    # training side effect and do not affect the returned forward output.
    N, C, H, W = 2, 4, 16, 16
    key = jax.random.PRNGKey(0)
    kx, kw1, kb1, kw2, kb2 = jax.random.split(key, 5)

    x = jax.random.normal(kx, (N, C, H, W), jnp.float32)
    params = {
        "w1": 0.1 * jax.random.normal(kw1, (C, C, 3, 3), jnp.float32),
        "b1": 0.1 * jax.random.normal(kb1, (C,), jnp.float32),
        "g1": jnp.ones((C,), jnp.float32),    # BatchNorm2d default weight
        "be1": jnp.zeros((C,), jnp.float32),  # BatchNorm2d default bias
        "w2": 0.1 * jax.random.normal(kw2, (C, C, 3, 3), jnp.float32),
        "b2": 0.1 * jax.random.normal(kb2, (C,), jnp.float32),
        "g2": jnp.ones((C,), jnp.float32),
        "be2": jnp.zeros((C,), jnp.float32),
    }

    out = jax.block_until_ready(residual_block_forward(x, params))
    ref = jax.block_until_ready(reference_forward(x, params))
    np.testing.assert_allclose(np.asarray(out), np.asarray(ref),
                               rtol=1e-4, atol=1e-4)
    print("KERNEL_OK")
</pallas_src>

<mosaic_0001>
module attributes {stable_mosaic.version = 11 : i64} {
  func.func @_conv1_kernel(%arg0: i32, %arg1: memref<32x64xf32, #tpu.memory_space<vmem>>, %arg2: memref<3x64x64xf32, #tpu.memory_space<vmem>>, %arg3: memref<1x64xf32, #tpu.memory_space<vmem>>, %arg4: memref<32x64xf32, #tpu.memory_space<vmem>>, %arg5: memref<1x1x64xf32, #tpu.memory_space<vmem>>, %arg6: memref<1x1x64xf32, #tpu.memory_space<vmem>>) attributes {dimension_semantics = [#tpu.dimension_semantics<parallel>], iteration_bounds = array<i64: 1>, scalar_prefetch = 0 : i64, scratch_operands = 0 : i64, tpu.core_type = #tpu.core_type<tc>, window_params = [{transform_indices = @transform_0, window_bounds = array<i64: 32, 64>}, {pipeline_mode = #tpu.pipeline_mode<synchronous>, transform_indices = @transform_1, window_bounds = array<i64: 3, 64, 64>}, {pipeline_mode = #tpu.pipeline_mode<synchronous>, transform_indices = @transform_2, window_bounds = array<i64: 1, 64>}, {transform_indices = @transform_3, window_bounds = array<i64: 32, 64>}, {transform_indices = @transform_4, window_bounds = array<i64: 1, 1, 64>}, {transform_indices = @transform_5, window_bounds = array<i64: 1, 1, 64>}]} {
    %c0 = arith.constant 0 : index
    %c0_0 = arith.constant 0 : index
    %0 = vector.load %arg1[%c0, %c0_0] : memref<32x64xf32, #tpu.memory_space<vmem>>, vector<32x64xf32>
    %c0_1 = arith.constant 0 : index
    %c0_2 = arith.constant 0 : index
    %1 = vector.load %arg3[%c0_1, %c0_2] : memref<1x64xf32, #tpu.memory_space<vmem>>, vector<1x64xf32>
    %c0_3 = arith.constant 0 : index
    %c0_4 = arith.constant 0 : index
    %c0_5 = arith.constant 0 : index
    %2 = vector.load %arg2[%c0_3, %c0_4, %c0_5] : memref<3x64x64xf32, #tpu.memory_space<vmem>>, vector<1x64x64xf32>
    %3 = vector.shape_cast %2 : vector<1x64x64xf32> to vector<64x64xf32>
    %cst = arith.constant dense<0.000000e+00> : vector<32x64xf32>
    %4 = tpu.matmul %0, %3, %cst {dimension_numbers = #tpu.dot_dimension_numbers<[1], [0], [0], [1], [0, 0, 1, 1], [], []>} : vector<32x64xf32>, vector<64x64xf32>, vector<32x64xf32> -> vector<32x64xf32>
    %c1 = arith.constant 1 : index
    %c0_6 = arith.constant 0 : index
    %c0_7 = arith.constant 0 : index
    %5 = vector.load %arg2[%c1, %c0_6, %c0_7] : memref<3x64x64xf32, #tpu.memory_space<vmem>>, vector<1x64x64xf32>
    %6 = vector.shape_cast %5 : vector<1x64x64xf32> to vector<64x64xf32>
    %cst_8 = arith.constant dense<0.000000e+00> : vector<32x64xf32>
    %7 = tpu.matmul %0, %6, %cst_8 {dimension_numbers = #tpu.dot_dimension_numbers<[1], [0], [0], [1], [0, 0, 1, 1], [], []>} : vector<32x64xf32>, vector<64x64xf32>, vector<32x64xf32> -> vector<32x64xf32>
    %c2 = arith.constant 2 : index
    %c0_9 = arith.constant 0 : index
    %c0_10 = arith.constant 0 : index
    %8 = vector.load %arg2[%c2, %c0_9, %c0_10] : memref<3x64x64xf32, #tpu.memory_space<vmem>>, vector<1x64x64xf32>
    %9 = vector.shape_cast %8 : vector<1x64x64xf32> to vector<64x64xf32>
    %cst_11 = arith.constant dense<0.000000e+00> : vector<32x64xf32>
    %10 = tpu.matmul %0, %9, %cst_11 {dimension_numbers = #tpu.dot_dimension_numbers<[1], [0], [0], [1], [0, 0, 1, 1], [], []>} : vector<32x64xf32>, vector<64x64xf32>, vector<32x64xf32> -> vector<32x64xf32>
    %11 = tpu.iota {dimensions = array<i32: 0>} : vector<32x1xi32>
    %c16_i32 = arith.constant 16 : i32
    %c0_i32 = arith.constant 0 : i32
    %12 = arith.cmpi eq, %c16_i32, %c0_i32 : i32
    %c1_i32 = arith.constant 1 : i32
    %13 = arith.select %12, %c1_i32, %c16_i32 : i32
    %14 = vector.broadcast %13 : i32 to vector<32x1xi32>
    %15 = arith.remsi %11, %14 : vector<32x1xi32>
    %c0_i32_12 = arith.constant 0 : i32
    %16 = vector.broadcast %c0_i32_12 : i32 to vector<32x1xi32>
    %17 = arith.cmpi ne, %15, %16 : vector<32x1xi32>
    %c0_i32_13 = arith.constant 0 : i32
    %18 = vector.broadcast %c0_i32_13 : i32 to vector<32x1xi32>
    %19 = arith.cmpi slt, %15, %18 : vector<32x1xi32>
    %c0_i32_14 = arith.constant 0 : i32
    %20 = arith.cmpi slt, %13, %c0_i32_14 : i32
    %21 = vector.broadcast %20 : i1 to vector<32x1xi1>
    %22 = vector.broadcast %21 : vector<32x1xi1> to vector<32x1xi1>
    %23 = arith.xori %19, %22 : vector<32x1xi1>
    %24 = arith.andi %23, %17 : vector<32x1xi1>
    %25 = vector.broadcast %13 : i32 to vector<32x1xi32>
    %26 = arith.addi %15, %25 : vector<32x1xi32>
    %27 = arith.select %24, %26, %15 : vector<32x1xi1>, vector<32x1xi32>
    %28 = vector.broadcast %1 : vector<1x64xf32> to vector<32x64xf32>
    %29 = arith.addf %7, %28 : vector<32x64xf32>
    %c1_i32_15 = arith.constant 1 : i32
    %30 = vector.broadcast %c1_i32_15 : i32 to vector<32x1xi32>
    %31 = arith.cmpi sge, %27, %30 : vector<32x1xi32>
    %c1_i32_16 = arith.constant 1 : i32
    %32 = tpu.dynamic_rotate %4 by %c1_i32_16 dim 0 : vector<32x64xf32>, i32 -> vector<32x64xf32>
    %cst_17 = arith.constant 0.000000e+00 : f32
    %33 = vector.shape_cast %31 : vector<32x1xi1> to vector<32x1xi1>
    %34 = vector.broadcast %33 : vector<32x1xi1> to vector<32x64xi1>
    %35 = vector.broadcast %cst_17 : f32 to vector<32x64xf32>
    %36 = arith.select %34, %32, %35 : vector<32x64xi1>, vector<32x64xf32>
    %37 = arith.addf %29, %36 : vector<32x64xf32>
    %c15_i32 = arith.constant 15 : i32
    %38 = vector.broadcast %c15_i32 : i32 to vector<32x1xi32>
    %39 = arith.cmpi slt, %27, %38 : vector<32x1xi32>
    %c31_i32 = arith.constant 31 : i32
    %40 = tpu.dynamic_rotate %10 by %c31_i32 dim 0 : vector<32x64xf32>, i32 -> vector<32x64xf32>
    %cst_18 = arith.constant 0.000000e+00 : f32
    %41 = vector.shape_cast %39 : vector<32x1xi1> to vector<32x1xi1>
    %42 = vector.broadcast %41 : vector<32x1xi1> to vector<32x64xi1>
    %43 = vector.broadcast %cst_18 : f32 to vector<32x64xf32>
    %44 = arith.select %42, %40, %43 : vector<32x64xi1>, vector<32x64xf32>
    %45 = arith.addf %37, %44 : vector<32x64xf32>
    %cst_19 = arith.constant dense<0.000000e+00> : vector<64xf32>
    %46 = vector.multi_reduction <add>, %45, %cst_19 [0] : vector<32x64xf32> to vector<64xf32>
    %47 = vector.shape_cast %46 : vector<64xf32> to vector<1x64xf32>
    %c0_20 = arith.constant 0 : index
    %c0_21 = arith.constant 0 : index
    %c0_22 = arith.constant 0 : index
    %48 = vector.load %arg5[%c0_20, %c0_21, %c0_22] : memref<1x1x64xf32, #tpu.memory_space<vmem>>, vector<1x1x64xf32>
    %49 = vector.shape_cast %48 : vector<1x1x64xf32> to vector<1x64xf32>
    %50 = vector.shape_cast %47 : vector<1x64xf32> to vector<1x1x64xf32>
    tpu.vector_store %arg5[%c0_20, %c0_21, %c0_22], %50 {strides = array<i32>} : memref<1x1x64xf32, #tpu.memory_space<vmem>>, vector<1x1x64xf32>,
    %51 = arith.mulf %45, %45 : vector<32x64xf32>
    %cst_23 = arith.constant dense<0.000000e+00> : vector<64xf32>
    %52 = vector.multi_reduction <add>, %51, %cst_23 [0] : vector<32x64xf32> to vector<64xf32>
    %53 = vector.shape_cast %52 : vector<64xf32> to vector<1x64xf32>
    %c0_24 = arith.constant 0 : index
    %c0_25 = arith.constant 0 : index
    %c0_26 = arith.constant 0 : index
    %54 = vector.load %arg6[%c0_24, %c0_25, %c0_26] : memref<1x1x64xf32, #tpu.memory_space<vmem>>, vector<1x1x64xf32>
    %55 = vector.shape_cast %54 : vector<1x1x64xf32> to vector<1x64xf32>
    %56 = vector.shape_cast %53 : vector<1x64xf32> to vector<1x1x64xf32>
    tpu.vector_store %arg6[%c0_24, %c0_25, %c0_26], %56 {strides = array<i32>} : memref<1x1x64xf32, #tpu.memory_space<vmem>>, vector<1x1x64xf32>,
    %c0_27 = arith.constant 0 : index
    %c0_28 = arith.constant 0 : index
    %57 = vector.load %arg4[%c0_27, %c0_28] : memref<32x64xf32, #tpu.memory_space<vmem>>, vector<32x64xf32>
    tpu.vector_store %arg4[%c0_27, %c0_28], %45 {strides = array<i32>} : memref<32x64xf32, #tpu.memory_space<vmem>>, vector<32x64xf32>,
    return
  }
  func.func @transform_0(%arg0: i32) -> (i32, i32) {
    %c0_i32 = arith.constant 0 : i32
    %c0_i32_0 = arith.constant 0 : i32
    return %arg0, %c0_i32 : i32, i32
  }
  func.func @transform_1(%arg0: i32) -> (i32, i32, i32) {
    %c0_i32 = arith.constant 0 : i32
    %c0_i32_0 = arith.constant 0 : i32
    %c0_i32_1 = arith.constant 0 : i32
    %c0_i32_2 = arith.constant 0 : i32
    return %c0_i32, %c0_i32_0, %c0_i32_1 : i32, i32, i32
  }
  func.func @transform_2(%arg0: i32) -> (i32, i32) {
    %c0_i32 = arith.constant 0 : i32
    %c0_i32_0 = arith.constant 0 : i32
    %c0_i32_1 = arith.constant 0 : i32
    return %c0_i32, %c0_i32_0 : i32, i32
  }
  func.func @transform_3(%arg0: i32) -> (i32, i32) {
    %c0_i32 = arith.constant 0 : i32
    %c0_i32_0 = arith.constant 0 : i32
    return %arg0, %c0_i32 : i32, i32
  }
  func.func @transform_4(%arg0: i32) -> (i32, i32, i32) {
    %c0_i32 = arith.constant 0 : i32
    %c0_i32_0 = arith.constant 0 : i32
    %c0_i32_1 = arith.constant 0 : i32
    return %arg0, %c0_i32, %c0_i32_0 : i32, i32, i32
  }
  func.func @transform_5(%arg0: i32) -> (i32, i32, i32) {
    %c0_i32 = arith.constant 0 : i32
    %c0_i32_0 = arith.constant 0 : i32
    %c0_i32_1 = arith.constant 0 : i32
    return %arg0, %c0_i32, %c0_i32_0 : i32, i32, i32
  }
}

</mosaic_0001>

<llo_original>
// kernel: tpu_custom_call.1
$region0: #{tpu_custom_call.1}
  #allocation0 [shape = 'u32[]', space=smem, size = 0x4, offset = 0x4, fixed_abs, tag = 'smem constant byte address 0x4 - core index']
  #allocation1 [shape = 'u32[144,128]{1,0:T(1,128)}', space=vmem, size = 0x12000, scoped, tag = 'internal scratch']
  %s0 = inlined_call_operand.hbm [shape: f32[32,64], index: 0, kind: input, shape index: {}]
  %s1 = inlined_call_operand.hbm [shape: f32[3,64,64], index: 1, kind: input, shape index: {}]
  %s2 = inlined_call_operand.hbm [shape: f32[1,64], index: 2, kind: input, shape index: {}]
  %s3 = inlined_call_operand.hbm [shape: f32[32,64], index: 3, kind: output, shape index: {0}]
  %s4 = inlined_call_operand.hbm [shape: f32[1,1,64], index: 4, kind: output, shape index: {1}]
  %s5 = inlined_call_operand.hbm [shape: f32[1,1,64], index: 5, kind: output, shape index: {2}]
  %6 = xla_tuple %s3, %s4, %s5
  %s7 = sld [smem:[#allocation0]]
  $region50: #{tpu_custom_call.1} parent=0
    _
  %s9 = ssub.s32 1, %s7
  %s10 = scalar_select 0, %s9, %s7
  $region1: #{tpu_custom_call.1} parent=0
    #allocation2 [shape = 'u8[16384]{0}', space=vmem, size = 0x4000, scoped, tag = 'input window, operand 0, single buffered']
    #allocation3 [shape = 's32[1]{0}', space=sflag, size = 0x4, scoped, tag = 'scoped memory for tpu_custom_call.1']
    #allocation4 [shape = 's32[1]{0}', space=sflag, size = 0x4, scoped, tag = 'scoped memory for tpu_custom_call.1']
    #allocation5 [shape = 'u8[98304]{0}', space=vmem, size = 0x18000, scoped, tag = 'input window, operand 1, single buffered']
    #allocation6 [shape = 's32[1]{0}', space=sflag, size = 0x4, scoped, tag = 'scoped memory for tpu_custom_call.1']
    #allocation7 [shape = 'u8[512]{0}', space=vmem, size = 0x400, scoped, tag = 'input window, operand 2, single buffered']
    #allocation8 [shape = 'u8[16384]{0}', space=vmem, size = 0x4000, scoped, tag = 'output window, operand 0, single buffered']
    #allocation9 [shape = 'u8[512]{0}', space=vmem, size = 0x400, scoped, tag = 'output window, operand 1, single buffered']
    #allocation10 [shape = 's32[1]{0}', space=sflag, size = 0x4, scoped, tag = 'scoped memory for tpu_custom_call.1']
    #allocation11 [shape = 'u8[512]{0}', space=vmem, size = 0x400, scoped, tag = 'output window, operand 2, single buffered']
    %11 = vsyncpa [#allocation3], 0
    %12 = vsyncpa [#allocation6], 0
    %13 = vsyncpa [#allocation4], 0
    %14 = vsyncpa [#allocation10], 0
    // Predicated region
    $region2: #{tpu_custom_call.1} parent=1 // pred_check
      _
    $region3: #{tpu_custom_call.1} parent=1 // pred_check_branch
      %16 = sbr.rel (0) target = $region5
    $region4: #{tpu_custom_call.1} parent=1 // pred_region
      %s18 = ssub.s32 512, 512
      %19 = vsyncadd [#allocation3], %s18
      %s20 = sshll.u32 [#allocation2], 4
      %s21 = int_to_ptr.vmem [resolvable:$true] %s20
      %26 = dma.hbm_to_vmem [thread:$0]  %s0, 512, %s21, [#allocation3], 128, 128, 8
    $region5: #{tpu_custom_call.1} parent=1 // pred_fallthru
      _
    // Predicated region
    $region6: #{tpu_custom_call.1} parent=1 // pred_check
      _
    $region7: #{tpu_custom_call.1} parent=1 // pred_check_branch
      %28 = sbr.rel (0) target = $region9
    $region8: #{tpu_custom_call.1} parent=1 // pred_region
      %s30 = ssub.s32 3072, 3072
      %31 = vsyncadd [#allocation6], %s30
      %s32 = sshll.u32 [#allocation5], 4
      %s33 = int_to_ptr.vmem [resolvable:$true] %s32
      %38 = dma.hbm_to_vmem [thread:$0]  %s1, 3072, %s33, [#allocation6], 128, 128, 8
    $region9: #{tpu_custom_call.1} parent=1 // pred_fallthru
      _
    // Predicated region
    $region10: #{tpu_custom_call.1} parent=1 // pred_check
      _
    $region11: #{tpu_custom_call.1} parent=1 // pred_check_branch
      %40 = sbr.rel (0) target = $region13
    $region12: #{tpu_custom_call.1} parent=1 // pred_region
      %s42 = ssub.s32 16, 16
      %43 = vsyncadd [#allocation6], %s42
      %s45 = sshll.u32 [#allocation7], 4
      %s46 = int_to_ptr.vmem [resolvable:$true] %s45
      %48 = dma.hbm_to_vmem [thread:$0]  %s2, 16, %s46, [#allocation6]
    $region13: #{tpu_custom_call.1} parent=1 // pred_fallthru
      _
    // Predicated region
    $region14: #{tpu_custom_call.1} parent=1 // pred_check
      _
    $region15: #{tpu_custom_call.1} parent=1 // pred_check_branch
      %50 = sbr.rel (0) target = $region17
    $region16: #{tpu_custom_call.1} parent=1 // pred_region
      %51 = dma.done [#allocation3], 512
    $region17: #{tpu_custom_call.1} parent=1 // pred_fallthru
      _
    // Predicated region
    $region18: #{tpu_custom_call.1} parent=1 // pred_check
      _
    $region19: #{tpu_custom_call.1} parent=1 // pred_check_branch
      %53 = sbr.rel (0) target = $region21
    $region20: #{tpu_custom_call.1} parent=1 // pred_region
      %54 = dma.done [#allocation6], 3072
    $region21: #{tpu_custom_call.1} parent=1 // pred_fallthru
      _
    // Predicated region
    $region22: #{tpu_custom_call.1} parent=1 // pred_check
      _
    $region23: #{tpu_custom_call.1} parent=1 // pred_check_branch
      %56 = sbr.rel (0) target = $region25
    $region24: #{tpu_custom_call.1} parent=1 // pred_region
      %57 = dma.done [#allocation6], 16
    $region25: #{tpu_custom_call.1} parent=1 // pred_fallthru
      _
    %v58 = vld [vmem:[#allocation2] sm:$0xff]
    %v59 = vld [vmem:[#allocation2 + $0x8] sm:$0xff]
    %v60 = vld [vmem:[#allocation2 + $0x10] sm:$0xff]
    %v61 = vld [vmem:[#allocation2 + $0x18] sm:$0xff]
    %v62 = vld [vmem:[#allocation7] sm:$0x1]
    %v63 = vld [vmem:[#allocation5] sm:$0xff]
    %v64 = vld [vmem:[#allocation5 + $0x8] sm:$0xff]
    %v65 = vld [vmem:[#allocation5 + $0x10] sm:$0xff]
    %v66 = vld [vmem:[#allocation5 + $0x18] sm:$0xff]
    %v67 = vld [vmem:[#allocation5 + $0x20] sm:$0xff]
    %v68 = vld [vmem:[#allocation5 + $0x28] sm:$0xff]
    %v69 = vld [vmem:[#allocation5 + $0x30] sm:$0xff]
    %v70 = vld [vmem:[#allocation5 + $0x38] sm:$0xff]
    %vm71 = vcmask 523264
    %v73 = vsel %vm71, %v58, 0
    %v76 = vsel %vm71, %v59, 0
    %v79 = vsel %vm71, %v60, 0
    %v82 = vsel %vm71, %v61, 0
    %84 = vmatprep.subr.mxu0 0.0
    %85 = vmatpush1.msra.mxu0 %v63
    %86 = vmatprep.subr.mxu0 0.0
    %87 = vmatpush1.msra.mxu0 %v64
    %88 = vmatprep.subr.mxu0 0.0
    %89 = vmatpush1.msra.mxu0 %v65
    %90 = vmatprep.subr.mxu0 0.0
    %91 = vmatpush1.msra.mxu0 %v66
    %92 = vmatprep.subr.mxu0 0.0
    %93 = vmatpush1.msra.mxu0 %v67
    %94 = vmatprep.subr.mxu0 0.0
    %95 = vmatpush1.msra.mxu0 %v68
    %96 = vmatprep.subr.mxu0 0.0
    %97 = vmatpush1.msra.mxu0 %v69
    %98 = vmatprep.subr.mxu0 0.0
    %99 = vmatpush1.msra.mxu0 %v70
    %100 = vmatprep.subr.mxu0 0.0
    %101 = vmatpush1.msra.mxu0 0.0
    %102 = vmatprep.subr.mxu0 0.0
    %103 = vmatpush1.msra.mxu0 0.0
    %104 = vmatprep.subr.mxu0 0.0
    %105 = vmatpush1.msra.mxu0 0.0
    %106 = vmatprep.subr.mxu0 0.0
    %107 = vmatpush1.msra.mxu0 0.0
    %108 = vmatprep.subr.mxu0 0.0
    %109 = vmatpush1.msra.mxu0 0.0
    %110 = vmatprep.subr.mxu0 0.0
    %111 = vmatpush1.msra.mxu0 0.0
    %112 = vmatprep.subr.mxu0 0.0
    %113 = vmatpush1.msra.mxu0 0.0
    %114 = vmatprep.subr.mxu0 0.0
    %115 = vmatpush1.msra.mxu0 0.0
    %116 = vmatprep.subr.mxu0 0.0
    %117 = vmatpush1.msra.mxu0 0.0
    %118 = vmatprep.subr.mxu0 0.0
    %119 = vmatpush1.msra.mxu0 0.0
    %120 = vmatprep.subr.mxu0 0.0
    %121 = vmatpush1.msra.mxu0 0.0
    %122 = vmatprep.subr.mxu0 0.0
    %123 = vmatpush1.msra.mxu0 0.0
    %124 = vmatprep.subr.mxu0 0.0
    %125 = vmatpush1.msra.mxu0 0.0
    %126 = vmatprep.subr.mxu0 0.0
    %127 = vmatpush1.msra.mxu0 0.0
    %128 = vmatprep.subr.mxu0 0.0
    %129 = vmatpush1.msra.mxu0 0.0
    %130 = vmatprep.subr.mxu0 0.0
    %131 = vmatpush1.msra.mxu0 0.0
    %132 = vmatprep.subr.mxu0 0.0
    %133 = vmatpush1.msra.mxu0 0.0
    %134 = vmatprep.subr.mxu0 0.0
    %135 = vmatpush1.msra.mxu0 0.0
    %136 = vmatprep.subr.mxu0 0.0
    %137 = vmatpush1.msra.mxu0 0.0
    %138 = vmatprep.subr.mxu0 0.0
    %139 = vmatpush1.msra.mxu0 0.0
    %140 = vmatprep.subr.mxu0 0.0
    %141 = vmatpush1.msra.mxu0 0.0
    %142 = vmatprep.subr.mxu0 0.0
    %143 = vmatpush1.msra.mxu0 0.0
    %144 = vmatprep.subr.mxu0 0.0
    %145 = vmatpush1.msra.mxu0 0.0
    %146 = vmatprep.subr.mxu0 0.0
    %147 = vmatpush1.msra.mxu0 0.0
    %148 = vmatprep.mubr.f32.mxu0 0.0
    %149 = vmatmul.mubr.f32.gmra.mrb[0].mxu0 %v73
    %v150 = vpop.f32.mrb[0].mxu0
    %v151 = vadd.f32 0.0, %v150
    %v152 = vpop.f32.mrb[0].mxu0
    %153 = vmatprep.mubr.f32.mxu0 0.0
    %154 = vmatmul.mubr.f32.gmra.mrb[0].mxu0 %v76
    %v155 = vpop.f32.mrb[0].mxu0
    %v156 = vadd.f32 0.0, %v155
    %v157 = vpop.f32.mrb[0].mxu0
    %158 = vmatprep.mubr.f32.mxu0 0.0
    %159 = vmatmul.mubr.f32.gmra.mrb[0].mxu0 %v79
    %v160 = vpop.f32.mrb[0].mxu0
    %v161 = vadd.f32 0.0, %v160
    %v162 = vpop.f32.mrb[0].mxu0
    %163 = vmatprep.mubr.f32.mxu0 0.0
    %164 = vmatmul.mubr.f32.gmra.mrb[0].mxu0 %v82
    %v165 = vpop.f32.mrb[0].mxu0
    %v166 = vadd.f32 0.0, %v165
    %v167 = vpop.f32.mrb[0].mxu0
    %168 = vdwg.mxu0
    %s169 = scalar_lea.vmem [#allocation5], 64
    %v170 = vld [vmem:[%s169] sm:$0xff]
    %v171 = vld [vmem:[%s169 + $0x8] sm:$0xff]
    %v172 = vld [vmem:[%s169 + $0x10] sm:$0xff]
    %v173 = vld [vmem:[%s169 + $0x18] sm:$0xff]
    %v174 = vld [vmem:[%s169 + $0x20] sm:$0xff]
    %v175 = vld [vmem:[%s169 + $0x28] sm:$0xff]
    %v176 = vld [vmem:[%s169 + $0x30] sm:$0xff]
    %v177 = vld [vmem:[%s169 + $0x38] sm:$0xff]
    %s178 = scalar_lea.vmem [#allocation5], 128
    %v179 = vld [vmem:[%s178] sm:$0xff]
    %v180 = vld [vmem:[%s178 + $0x8] sm:$0xff]
    %v181 = vld [vmem:[%s178 + $0x10] sm:$0xff]
    %v182 = vld [vmem:[%s178 + $0x18] sm:$0xff]
    %v183 = vld [vmem:[%s178 + $0x20] sm:$0xff]
    %v184 = vld [vmem:[%s178 + $0x28] sm:$0xff]
    %v185 = vld [vmem:[%s178 + $0x30] sm:$0xff]
    %v186 = vld [vmem:[%s178 + $0x38] sm:$0xff]
    %187 = vmatprep.subr.mxu0 0.0
    %188 = vmatpush1.msra.mxu0 %v179
    %189 = vmatprep.subr.mxu0 0.0
    %190 = vmatpush1.msra.mxu0 %v180
    %191 = vmatprep.subr.mxu0 0.0
    %192 = vmatpush1.msra.mxu0 %v181
    %193 = vmatprep.subr.mxu0 0.0
    %194 = vmatpush1.msra.mxu0 %v182
    %195 = vmatprep.subr.mxu0 0.0
    %196 = vmatpush1.msra.mxu0 %v183
    %197 = vmatprep.subr.mxu0 0.0
    %198 = vmatpush1.msra.mxu0 %v184
    %199 = vmatprep.subr.mxu0 0.0
    %200 = vmatpush1.msra.mxu0 %v185
    %201 = vmatprep.subr.mxu0 0.0
    %202 = vmatpush1.msra.mxu0 %v186
    %203 = vmatprep.subr.mxu0 0.0
    %204 = vmatpush1.msra.mxu0 0.0
    %205 = vmatprep.subr.mxu0 0.0
    %206 = vmatpush1.msra.mxu0 0.0
    %207 = vmatprep.subr.mxu0 0.0
    %208 = vmatpush1.msra.mxu0 0.0
    %209 = vmatprep.subr.mxu0 0.0
    %210 = vmatpush1.msra.mxu0 0.0
    %211 = vmatprep.subr.mxu0 0.0
    %212 = vmatpush1.msra.mxu0 0.0
    %213 = vmatprep.subr.mxu0 0.0
    %214 = vmatpush1.msra.mxu0 0.0
    %215 = vmatprep.subr.mxu0 0.0
    %216 = vmatpush1.msra.mxu0 0.0
    %217 = vmatprep.subr.mxu0 0.0
    %218 = vmatpush1.msra.mxu0 0.0
    %219 = vmatprep.subr.mxu0 0.0
    %220 = vmatpush1.msra.mxu0 0.0
    %221 = vmatprep.subr.mxu0 0.0
    %222 = vmatpush1.msra.mxu0 0.0
    %223 = vmatprep.subr.mxu0 0.0
    %224 = vmatpush1.msra.mxu0 0.0
    %225 = vmatprep.subr.mxu0 0.0
    %226 = vmatpush1.msra.mxu0 0.0
    %227 = vmatprep.subr.mxu0 0.0
    %228 = vmatpush1.msra.mxu0 0.0
    %229 = vmatprep.subr.mxu0 0.0
    %230 = vmatpush1.msra.mxu0 0.0
    %231 = vmatprep.subr.mxu0 0.0
    %232 = vmatpush1.msra.mxu0 0.0
    %233 = vmatprep.subr.mxu0 0.0
    %234 = vmatpush1.msra.mxu0 0.0
    %235 = vmatprep.subr.mxu0 0.0
    %236 = vmatpush1.msra.mxu0 0.0
    %237 = vmatprep.subr.mxu0 0.0
    %238 = vmatpush1.msra.mxu0 0.0
    %239 = vmatprep.subr.mxu0 0.0
    %240 = vmatpush1.msra.mxu0 0.0
    %241 = vmatprep.subr.mxu0 0.0
    %242 = vmatpush1.msra.mxu0 0.0
    %243 = vmatprep.subr.mxu0 0.0
    %244 = vmatpush1.msra.mxu0 0.0
    %245 = vmatprep.subr.mxu0 0.0
    %246 = vmatpush1.msra.mxu0 0.0
    %247 = vmatprep.subr.mxu0 0.0
    %248 = vmatpush1.msra.mxu0 0.0
    %249 = vmatprep.subr.mxu0 0.0
    %250 = vmatpush1.msra.mxu0 0.0
    %251 = vmatprep.mubr.f32.mxu0 0.0
    %252 = vmatmul.mubr.f32.gmra.mrb[0].mxu0 %v73
    %v253 = vpop.f32.mrb[0].mxu0
    %v254 = vadd.f32 0.0, %v253
    %v255 = vpop.f32.mrb[0].mxu0
    %256 = vmatprep.mubr.f32.mxu0 0.0
    %257 = vmatmul.mubr.f32.gmra.mrb[0].mxu0 %v76
    %v258 = vpop.f32.mrb[0].mxu0
    %v259 = vadd.f32 0.0, %v258
    %v260 = vpop.f32.mrb[0].mxu0
    %261 = vmatprep.mubr.f32.mxu0 0.0
    %262 = vmatmul.mubr.f32.gmra.mrb[0].mxu0 %v79
    %v263 = vpop.f32.mrb[0].mxu0
    %v264 = vadd.f32 0.0, %v263
    %v265 = vpop.f32.mrb[0].mxu0
    %266 = vmatprep.mubr.f32.mxu0 0.0
    %267 = vmatmul.mubr.f32.gmra.mrb[0].mxu0 %v82
    %v268 = vpop.f32.mrb[0].mxu0
    %v269 = vadd.f32 0.0, %v268
    %v270 = vpop.f32.mrb[0].mxu0
    %271 = vdwg.mxu0
    %v272 = vlaneseq
    %v273 = vshrl.u32 %v272, 7
    %v274 = vadd.s32 %v273, 8
    %v275 = vadd.s32 %v273, 16
    %v276 = vadd.s32 %v273, 24
    %vm277 = vcmp.lt.s32.totalorder %v273, 0
    %v278 = vsub.s32 0, %v273
    %v279 = vsel %vm277, %v278, %v273
    %v280 = vshrl.u32 %v279, 4
    %v281 = vand.u32 %v279, 15
    %v282 = vsub.s32 0, %v281
    %v283 = vsel %vm277, %v282, %v281
    %vm284 = vcmp.lt.s32.totalorder %v274, 0
    %v285 = vsub.s32 0, %v274
    %v286 = vsel %vm284, %v285, %v274
    %v287 = vshrl.u32 %v286, 4
    %v288 = vand.u32 %v286, 15
    %v289 = vsub.s32 0, %v288
    %v290 = vsel %vm284, %v289, %v288
    %vm291 = vcmp.lt.s32.totalorder %v275, 0
    %v292 = vsub.s32 0, %v275
    %v293 = vsel %vm291, %v292, %v275
    %v294 = vshrl.u32 %v293, 4
    %v295 = vand.u32 %v293, 15
    %v296 = vsub.s32 0, %v295
    %v297 = vsel %vm291, %v296, %v295
    %vm298 = vcmp.lt.s32.totalorder %v276, 0
    %v299 = vsub.s32 0, %v276
    %v300 = vsel %vm298, %v299, %v276
    %v301 = vshrl.u32 %v300, 4
    %v302 = vand.u32 %v300, 15
    %v303 = vsub.s32 0, %v302
    %v304 = vsel %vm298, %v303, %v302
    %vm305 = vcmp.ne.s32.totalorder %v283, 0
    %vm306 = vcmp.ne.s32.totalorder %v290, 0
    %vm307 = vcmp.ne.s32.totalorder %v297, 0
    %vm308 = vcmp.ne.s32.totalorder %v304, 0
    %vm309 = vcmp.lt.s32.totalorder %v283, 0
    %vm310 = vcmp.lt.s32.totalorder %v290, 0
    %vm311 = vcmp.lt.s32.totalorder %v297, 0
    %vm312 = vcmp.lt.s32.totalorder %v304, 0
    %vm313 = vmand %vm309, %vm305
    %vm314 = vmand %vm310, %vm306
    %vm315 = vmand %vm311, %vm307
    %vm316 = vmand %vm312, %vm308
    %v317 = vadd.s32 %v283, 16
    %v318 = vadd.s32 %v290, 16
    %v319 = vadd.s32 %v297, 16
    %v320 = vadd.s32 %v304, 16
    %v321 = vsel %vm313, %v317, %v283
    %v322 = vsel %vm314, %v318, %v290
    %v323 = vsel %vm315, %v319, %v297
    %v324 = vsel %vm316, %v320, %v304
    %v326 = vlaneseq
    %v327 = vshrl.u32 %v326, 7
    %v328 = vsub.s32 0, %v327
    %v329 = vrot.slane %v62, %v328
    %331 = vmatprep.subr.mxu0 0.0
    %332 = vmatpush1.msra.mxu0 %v170
    %333 = vmatprep.subr.mxu0 0.0
    %334 = vmatpush1.msra.mxu0 %v171
    %335 = vmatprep.subr.mxu0 0.0
    %336 = vmatpush1.msra.mxu0 %v172
    %337 = vmatprep.subr.mxu0 0.0
    %338 = vmatpush1.msra.mxu0 %v173
    %339 = vmatprep.subr.mxu0 0.0
    %340 = vmatpush1.msra.mxu0 %v174
    %341 = vmatprep.subr.mxu0 0.0
    %342 = vmatpush1.msra.mxu0 %v175
    %343 = vmatprep.subr.mxu0 0.0
    %344 = vmatpush1.msra.mxu0 %v176
    %345 = vmatprep.subr.mxu0 0.0
    %346 = vmatpush1.msra.mxu0 %v177
    %347 = vmatprep.subr.mxu0 0.0
    %348 = vmatpush1.msra.mxu0 0.0
    %349 = vmatprep.subr.mxu0 0.0
    %350 = vmatpush1.msra.mxu0 0.0
    %351 = vmatprep.subr.mxu0 0.0
    %352 = vmatpush1.msra.mxu0 0.0
    %353 = vmatprep.subr.mxu0 0.0
    %354 = vmatpush1.msra.mxu0 0.0
    %355 = vmatprep.subr.mxu0 0.0
    %356 = vmatpush1.msra.mxu0 0.0
    %357 = vmatprep.subr.mxu0 0.0
    %358 = vmatpush1.msra.mxu0 0.0
    %359 = vmatprep.subr.mxu0 0.0
    %360 = vmatpush1.msra.mxu0 0.0
    %361 = vmatprep.subr.mxu0 0.0
    %362 = vmatpush1.msra.mxu0 0.0
    %363 = vmatprep.subr.mxu0 0.0
    %364 = vmatpush1.msra.mxu0 0.0
    %365 = vmatprep.subr.mxu0 0.0
    %366 = vmatpush1.msra.mxu0 0.0
    %367 = vmatprep.subr.mxu0 0.0
    %368 = vmatpush1.msra.mxu0 0.0
    %369 = vmatprep.subr.mxu0 0.0
    %370 = vmatpush1.msra.mxu0 0.0
    %371 = vmatprep.subr.mxu0 0.0
    %372 = vmatpush1.msra.mxu0 0.0
    %373 = vmatprep.subr.mxu0 0.0
    %374 = vmatpush1.msra.mxu0 0.0
    %375 = vmatprep.subr.mxu0 0.0
    %376 = vmatpush1.msra.mxu0 0.0
    %377 = vmatprep.subr.mxu0 0.0
    %378 = vmatpush1.msra.mxu0 0.0
    %379 = vmatprep.subr.mxu0 0.0
    %380 = vmatpush1.msra.mxu0 0.0
    %381 = vmatprep.subr.mxu0 0.0
    %382 = vmatpush1.msra.mxu0 0.0
    %383 = vmatprep.subr.mxu0 0.0
    %384 = vmatpush1.msra.mxu0 0.0
    %385 = vmatprep.subr.mxu0 0.0
    %386 = vmatpush1.msra.mxu0 0.0
    %387 = vmatprep.subr.mxu0 0.0
    %388 = vmatpush1.msra.mxu0 0.0
    %389 = vmatprep.subr.mxu0 0.0
    %390 = vmatpush1.msra.mxu0 0.0
    %391 = vmatprep.subr.mxu0 0.0
    %392 = vmatpush1.msra.mxu0 0.0
    %393 = vmatprep.subr.mxu0 0.0
    %394 = vmatpush1.msra.mxu0 0.0
    %395 = vmatprep.mubr.f32.mxu0 0.0
    %396 = vmatmul.mubr.f32.gmra.mrb[0].mxu0 %v73
    %v397 = vpop.f32.mrb[0].mxu0
    %v398 = vadd.f32 %v329, %v397
    %v399 = vpop.f32.mrb[0].mxu0
    %400 = vmatprep.mubr.f32.mxu0 0.0
    %401 = vmatmul.mubr.f32.gmra.mrb[0].mxu0 %v76
    %v402 = vpop.f32.mrb[0].mxu0
    %v403 = vadd.f32 %v329, %v402
    %v404 = vpop.f32.mrb[0].mxu0
    %405 = vmatprep.mubr.f32.mxu0 0.0
    %406 = vmatmul.mubr.f32.gmra.mrb[0].mxu0 %v79
    %v407 = vpop.f32.mrb[0].mxu0
    %v408 = vadd.f32 %v329, %v407
    %v409 = vpop.f32.mrb[0].mxu0
    %410 = vmatprep.mubr.f32.mxu0 0.0
    %411 = vmatmul.mubr.f32.gmra.mrb[0].mxu0 %v82
    %v412 = vpop.f32.mrb[0].mxu0
    %v413 = vadd.f32 %v329, %v412
    %v414 = vpop.f32.mrb[0].mxu0
    %415 = vdwg.mxu0
    %vm416 = vcmp.ge.s32.totalorder %v321, 1
    %vm417 = vcmp.ge.s32.totalorder %v322, 1
    %vm418 = vcmp.ge.s32.totalorder %v323, 1
    %vm419 = vcmp.ge.s32.totalorder %v324, 1
    %v420 = vrot.slane %v151, 7
    %v421 = vrot.slane %v156, 7
    %v422 = vrot.slane %v161, 7
    %v423 = vrot.slane %v166, 7
    %vm424 = vcmp.lt.s32.totalorder %v273, 1
    %v425 = vsel %vm424, %v422, %v423
    %v426 = vsel %vm424, %v421, %v422
    %v427 = vsel %vm424, %v420, %v421
    %v428 = vsel %vm424, %v423, %v420
    %v429 = vsel %vm416, 1, 0
    %v430 = vsel %vm417, 1, 0
    %v431 = vsel %vm418, 1, 0
    %v432 = vsel %vm419, 1, 0
    %vm433 = vcmp.eq.s32.totalorder %v429, 1
    %vm434 = vcmp.eq.s32.totalorder %v430, 1
    %vm435 = vcmp.eq.s32.totalorder %v431, 1
    %vm436 = vcmp.eq.s32.totalorder %v432, 1
    %v437 = vsel %vm433, %v428, 0.0
    %v438 = vsel %vm434, %v427, 0.0
    %v439 = vsel %vm435, %v426, 0.0
    %v440 = vsel %vm436, %v425, 0.0
    %v441 = vadd.f32 %v398, %v437
    %v442 = vadd.f32 %v403, %v438
    %v443 = vadd.f32 %v408, %v439
    %v444 = vadd.f32 %v413, %v440
    %vm445 = vcmp.lt.s32.totalorder %v321, 15
    %vm446 = vcmp.lt.s32.totalorder %v322, 15
    %vm447 = vcmp.lt.s32.totalorder %v323, 15
    %vm448 = vcmp.lt.s32.totalorder %v324, 15
    %v449 = vrot.slane %v254, 1
    %v450 = vrot.slane %v259, 1
    %v451 = vrot.slane %v264, 1
    %v452 = vrot.slane %v269, 1
    %vm453 = vcmp.lt.s32.totalorder %v273, 7
    %v454 = vsel %vm453, %v451, %v452
    %v455 = vsel %vm453, %v450, %v451
    %v456 = vsel %vm453, %v449, %v450
    %v457 = vsel %vm453, %v452, %v449
    %v458 = vsel %vm445, 1, 0
    %v459 = vsel %vm446, 1, 0
    %v460 = vsel %vm447, 1, 0
    %v461 = vsel %vm448, 1, 0
    %vm462 = vcmp.eq.s32.totalorder %v458, 1
    %vm463 = vcmp.eq.s32.totalorder %v459, 1
    %vm464 = vcmp.eq.s32.totalorder %v460, 1
    %vm465 = vcmp.eq.s32.totalorder %v461, 1
    %v466 = vsel %vm462, %v456, 0.0
    %v467 = vsel %vm463, %v455, 0.0
    %v468 = vsel %vm464, %v454, 0.0
    %v469 = vsel %vm465, %v457, 0.0
    %v470 = vadd.f32 %v441, %v466
    %v471 = vadd.f32 %v442, %v467
    %v472 = vadd.f32 %v443, %v468
    %v473 = vadd.f32 %v444, %v469
    %v474 = vsel %vm71, %v470, 0.0
    %v475 = vsel %vm71, %v471, 0.0
    %v476 = vadd.f32 %v474, %v475
    %v477 = vsel %vm71, %v472, 0.0
    %v478 = vadd.f32 %v476, %v477
    %v479 = vsel %vm71, %v473, 0.0
    %v480 = vadd.f32 %v478, %v479
    %v481 = vrot.slane %v480, 4
    %v482 = vadd.f32 %v480, %v481
    %v483 = vrot.slane %v482, 2
    %v484 = vadd.f32 %v482, %v483
    %v485 = vrot.slane %v484, 1
    %v486 = vadd.f32 %v484, %v485
    %vm487 = vcmask 516096
    %488 = vst.msk [vmem:[#allocation9] sm:$0x1] %vm487, %v486
    %v489 = vmul.f32 %v470, %v470
    %v490 = vmul.f32 %v471, %v471
    %v491 = vmul.f32 %v472, %v472
    %v492 = vmul.f32 %v473, %v473
    %v493 = vsel %vm71, %v489, 0.0
    %v494 = vsel %vm71, %v490, 0.0
    %v495 = vadd.f32 %v493, %v494
    %v496 = vsel %vm71, %v491, 0.0
    %v497 = vadd.f32 %v495, %v496
    %v498 = vsel %vm71, %v492, 0.0
    %v499 = vadd.f32 %v497, %v498
    %v500 = vrot.slane %v499, 4
    %v501 = vadd.f32 %v499, %v500
    %v502 = vrot.slane %v501, 2
    %v503 = vadd.f32 %v501, %v502
    %v504 = vrot.slane %v503, 1
    %v505 = vadd.f32 %v503, %v504
    %506 = vst.msk [vmem:[#allocation11] sm:$0x1] %vm487, %v505
    %507 = vst.msk [vmem:[#allocation8] sm:$0xff] %vm71, %v470
    %508 = vst.msk [vmem:[#allocation8 + $0x8] sm:$0xff] %vm71, %v471
    %509 = vst.msk [vmem:[#allocation8 + $0x10] sm:$0xff] %vm71, %v472
    %510 = vst.msk [vmem:[#allocation8 + $0x18] sm:$0xff] %vm71, %v473
    // Predicated region
    $region26: #{tpu_custom_call.1} parent=1 // pred_check
      _
    $region27: #{tpu_custom_call.1} parent=1 // pred_check_branch
      %512 = sbr.rel (0) target = $region29
    $region28: #{tpu_custom_call.1} parent=1 // pred_region
      %s514 = ssub.s32 512, 512
      %515 = vsyncadd [#allocation4], %s514
      %s516 = sshll.u32 [#allocation8], 4
      %s517 = int_to_ptr.vmem [resolvable:$true] %s516
      %522 = dma.vmem_to_hbm [thread:$0]  %s517, 512, %s3, [#allocation4], 128, 128, 8
    $region29: #{tpu_custom_call.1} parent=1 // pred_fallthru
      _
    // Predicated region
    $region30: #{tpu_custom_call.1} parent=1 // pred_check
      _
    $region31: #{tpu_custom_call.1} parent=1 // pred_check_branch
      %524 = sbr.rel (0) target = $region33
    $region32: #{tpu_custom_call.1} parent=1 // pred_region
      %s526 = ssub.s32 16, 16
      %527 = vsyncadd [#allocation10], %s526
      %s529 = sshll.u32 [#allocation9], 4
      %s530 = int_to_ptr.vmem [resolvable:$true] %s529
      %532 = dma.vmem_to_hbm [thread:$0]  %s530, 16, %s4, [#allocation10]
    $region33: #{tpu_custom_call.1} parent=1 // pred_fallthru
      _
    // Predicated region
    $region34: #{tpu_custom_call.1} parent=1 // pred_check
      _
    $region35: #{tpu_custom_call.1} parent=1 // pred_check_branch
      %534 = sbr.rel (0) target = $region37
    $region36: #{tpu_custom_call.1} parent=1 // pred_region
      %s536 = ssub.s32 16, 16
      %537 = vsyncadd [#allocation10], %s536
      %s539 = sshll.u32 [#allocation11], 4
      %s540 = int_to_ptr.vmem [resolvable:$true] %s539
      %542 = dma.vmem_to_hbm [thread:$0]  %s540, 16, %s5, [#allocation10]
    $region37: #{tpu_custom_call.1} parent=1 // pred_fallthru
      _
    // Predicated region
    $region38: #{tpu_custom_call.1} parent=1 // pred_check
      _
    $region39: #{tpu_custom_call.1} parent=1 // pred_check_branch
      %544 = sbr.rel (0) target = $region41
    $region40: #{tpu_custom_call.1} parent=1 // pred_region
      %545 = dma.done [#allocation4], 512
    $region41: #{tpu_custom_call.1} parent=1 // pred_fallthru
      _
    // Predicated region
    $region42: #{tpu_custom_call.1} parent=1 // pred_check
      _
    $region43: #{tpu_custom_call.1} parent=1 // pred_check_branch
      %547 = sbr.rel (0) target = $region45
    $region44: #{tpu_custom_call.1} parent=1 // pred_region
      %548 = dma.done [#allocation10], 16
    $region45: #{tpu_custom_call.1} parent=1 // pred_fallthru
      _
    // Predicated region
    $region46: #{tpu_custom_call.1} parent=1 // pred_check
      _
    $region47: #{tpu_custom_call.1} parent=1 // pred_check_branch
      %550 = sbr.rel (0) target = $region49
    $region48: #{tpu_custom_call.1} parent=1 // pred_region
      %551 = dma.done [#allocation10], 16
    $region49: #{tpu_custom_call.1} parent=1 // pred_fallthru
      _
    %552 = vsyncpa [#allocation3], 1
    %553 = vsyncpa [#allocation6], 1
    %554 = vsyncpa [#allocation4], 1
    %555 = vsyncpa [#allocation10], 1

</llo_original>
